<compile_context>
chip_gen: v5e
topology: v5e:2x2
jax: 0.10.0
libtpu: 0.0.40
codegen_flags: <defaults>
</compile_context>

<pallas_src>
import functools

import jax
import jax.numpy as jnp
from jax import lax
from jax.experimental import pallas as pl
from jax.experimental.pallas import tpu as pltpu

# ------------------------- model hyper-params (small) -------------------------
IN_C = 4      # IN
M1   = 8
M2   = 16
K    = 3      # kernel_size of last conv
PAD  = K // 2
N, H, W = 2, 16, 16
HW    = H * W
LANES = N * HW                     # 512 -- both images side by side on the lane axis

# tap order (row-major over the KxK window), shared by wrapper packing and kernel
TAPS = [(ky - PAD, kx - PAD) for ky in range(K) for kx in range(K)]

# packed-parameter slab layout (rows = stacked blocks, width = LANES, lane-aligned)
ROW_W1   = 0                        # (M1, IN)      conv1 weight
ROW_B1   = M1                       # (M1, LANES)   conv1 bias, lane-broadcast
ROW_WEFF = 2 * M1                   # (IN, 9*M1)    fused conv2->conv3 weights
ROW_BMAP = 2 * M1 + IN_C            # (IN, LANES)   fused bias map (b2-under-mask + b3)
ROW_MASK = 2 * M1 + 2 * IN_C        # (8*M1, LANES) 8 boundary masks, pre-expanded
P_ROWS   = ROW_MASK + 8 * M1        # 88


def weight_norm(v, g):
    """PyTorch nn.utils.weight_norm with dim=0: w = g * v / ||v|| (per out-channel)."""
    norm = jnp.sqrt(jnp.sum(v * v, axis=(1, 2, 3), keepdims=True))
    return (g.reshape(-1, 1, 1, 1) / norm) * v


def make_params(key):
    ks = jax.random.split(key, 9)
    # conv1: 1x1, IN -> M1
    v1 = jax.random.normal(ks[0], (M1, IN_C, 1, 1), jnp.float32) * 0.3
    g1 = 1.0 + 0.1 * jax.random.normal(ks[1], (M1,), jnp.float32)
    b1 = 0.1 * jax.random.normal(ks[2], (M1,), jnp.float32)
    # conv2: 1x1, M1 -> M2
    v2 = jax.random.normal(ks[3], (M2, M1, 1, 1), jnp.float32) * 0.3
    g2 = 1.0 + 0.1 * jax.random.normal(ks[4], (M2,), jnp.float32)
    b2 = 0.1 * jax.random.normal(ks[5], (M2,), jnp.float32)
    # conv3: KxK, M2 -> IN
    v3 = jax.random.normal(ks[6], (IN_C, M2, K, K), jnp.float32) * 0.3
    g3 = 1.0 + 0.1 * jax.random.normal(ks[7], (IN_C,), jnp.float32)
    b3 = 0.1 * jax.random.normal(ks[8], (IN_C,), jnp.float32)

    w1 = weight_norm(v1, g1)   # (M1, IN, 1, 1)
    w2 = weight_norm(v2, g2)   # (M2, M1, 1, 1)
    w3 = weight_norm(v3, g3)   # (IN, M2, K, K)
    return (w1, b1, w2, b2, w3, b3)


# ------------------------------ Pallas kernel ---------------------------------
def _kernel(x_ref, p_ref, o_ref):
    # Static slices of the packed parameter slab (channels on sublanes).
    w1m  = p_ref[ROW_W1:ROW_W1 + M1, 0:IN_C]            # (M1, IN)
    b1r  = p_ref[ROW_B1:ROW_B1 + M1, :]                 # (M1, LANES)
    weff = p_ref[ROW_WEFF:ROW_WEFF + IN_C, 0:K * K * M1]  # (IN, 9*M1)
    bmap = p_ref[ROW_BMAP:ROW_BMAP + IN_C, :]            # (IN, LANES)

    # Both images side by side on the lane axis: (IN, N*HW) = (4, 512).
    x_cat = jnp.concatenate([x_ref[n] for n in range(N)], axis=1)

    # conv1 (1x1) + bias + ReLU -- one lane-dense matmul.
    h1 = jnp.maximum(
        jnp.dot(w1m, x_cat, preferred_element_type=jnp.float32) + b1r, 0.0)  # (M1, LANES)

    # conv2 fused into conv3: 9 lane-rolled copies of h1, each multiplied by its
    # precomputed boundary mask (one vmul per tap; center tap needs no mask), stacked
    # along the channel axis and contracted in ONE MXU matmul against W_eff.
    taps = []
    mrow = ROW_MASK
    for dy, dx in TAPS:
        shift = (-(dy * W + dx)) % LANES       # out[L] = h1[L + dy*W + dx]
        t = pltpu.roll(h1, shift, 1) if shift else h1
        if dy or dx:
            t = t * p_ref[mrow:mrow + M1, :]   # pre-expanded {0,1} mask, single vmul
            mrow += M1
        taps.append(t)
    stacked = jnp.concatenate(taps, axis=0)    # (9*M1, LANES)
    y = jnp.dot(weff, stacked, preferred_element_type=jnp.float32)  # (IN, LANES)

    # fused bias map (b2-under-mask + b3) + residual; lane-dense unmasked stores.
    out = y + bmap + x_cat
    for n in range(N):
        o_ref[n] = out[:, n * HW:(n + 1) * HW].astype(o_ref.dtype)


# ------------------------------ wrapper ----------------------------------------
def _pack_slab(params):
    """Pack weights, biases, fused conv2->conv3 weights, bias map and boundary masks
    into a single lane-aligned fp32 slab (2 kernel operands total)."""
    w1, b1, w2, b2, w3, b3 = params
    w1m = w1[:, :, 0, 0]                       # (M1, IN)
    w2m = w2[:, :, 0, 0]                       # (M2, M1)

    # Per-tap boundary masks over one image (HW,), in TAPS order.
    p = jnp.arange(HW)
    yy, xx = p // W, p % W
    masks = []
    for dy, dx in TAPS:
        m = ((yy + dy >= 0) & (yy + dy < H) &
             (xx + dx >= 0) & (xx + dx < W)).astype(jnp.float32)
        masks.append(m)

    # Fused weights W_eff_k = w3_k @ w2  and bias coefficients c_k = w3_k @ b2.
    weff_blocks, bias_coeff = [], []
    for k, (ky, kx) in enumerate((a, b) for a in range(K) for b in range(K)):
        w3k = w3[:, :, ky, kx]                 # (IN, M2)
        weff_blocks.append(w3k @ w2m)          # (IN, M1)
        bias_coeff.append(w3k @ b2)            # (IN,)
    weff = jnp.concatenate(weff_blocks, axis=1)            # (IN, 9*M1)

    # Per-pixel bias map: b3 + sum_k c_k * mask_k, tiled across the N images.
    bmap_hw = b3[:, None] + sum(c[:, None] * m[None, :]
                                for c, m in zip(bias_coeff, masks))
    bmap = jnp.tile(bmap_hw, (1, N))                        # (IN, LANES)

    # Boundary masks for the 8 non-center taps, tiled across images and pre-expanded
    # to M1 sublane rows so the kernel applies each with a single vmul.
    mask_rows = []
    for k, (dy, dx) in enumerate(TAPS):
        if dy == 0 and dx == 0:
            continue
        mfull = jnp.tile(masks[k], (N,))                    # (LANES,)
        mask_rows.append(jnp.broadcast_to(mfull[None, :], (M1, LANES)))
    mask_block = jnp.concatenate(mask_rows, axis=0)         # (8*M1, LANES)

    slab = jnp.zeros((P_ROWS, LANES), jnp.float32)
    slab = slab.at[ROW_W1:ROW_W1 + M1, 0:IN_C].set(w1m)
    slab = slab.at[ROW_B1:ROW_B1 + M1, :].set(
        jnp.broadcast_to(b1[:, None], (M1, LANES)))
    slab = slab.at[ROW_WEFF:ROW_WEFF + IN_C, 0:K * K * M1].set(weff)
    slab = slab.at[ROW_BMAP:ROW_BMAP + IN_C, :].set(bmap)
    slab = slab.at[ROW_MASK:ROW_MASK + 8 * M1, :].set(mask_block)
    return slab


@jax.jit
def block_forward_pallas(x_nchw, params):
    slab = _pack_slab(params)

    # NCHW -> (N, C, H*W) is a pure (free) reshape; no transposes needed.
    x_flat = x_nchw.reshape(N, IN_C, HW).astype(jnp.float32)

    # Single grid step: the whole batch fits comfortably in VMEM on v5e/v6e/v7x and
    # the kernel is fixed-overhead bound, so more steps would only add overhead.
    out = pl.pallas_call(
        _kernel,
        out_shape=jax.ShapeDtypeStruct((N, IN_C, HW), jnp.float32),
        grid_spec=pltpu.PrefetchScalarGridSpec(
            num_scalar_prefetch=0,
            grid=(1,),
            in_specs=[
                pl.BlockSpec((N, IN_C, HW), lambda i: (0, 0, 0)),
                pl.BlockSpec((P_ROWS, LANES), lambda i: (0, 0)),
            ],
            out_specs=pl.BlockSpec((N, IN_C, HW), lambda i: (0, 0, 0)),
        ),
        compiler_params=pltpu.CompilerParams(
            dimension_semantics=("arbitrary",)),
    )(x_flat, slab)

    return out.reshape(N, IN_C, H, W)


# ----------------------------- plain-JAX reference ----------------------------
def block_forward_ref(x_nchw, params):
    w1, b1, w2, b2, w3, b3 = params

    def conv(x, w, b, pad):
        y = lax.conv_general_dilated(
            x, w, window_strides=(1, 1), padding=[(pad, pad), (pad, pad)],
            dimension_numbers=("NCHW", "OIHW", "NCHW"))
        return y + b.reshape(1, -1, 1, 1)

    h = jax.nn.relu(conv(x_nchw, w1, b1, 0))
    h = conv(h, w2, b2, 0)
    h = conv(h, w3, b3, K // 2)
    return h + x_nchw


# ----------------------------------- main --------------------------------------
if __name__ == "__main__":
    key = jax.random.PRNGKey(0)
    kx_, kp = jax.random.split(key)
    x = jax.random.normal(kx_, (N, IN_C, H, W), jnp.float32)   # NCHW like PyTorch
    params = make_params(kp)

    out = jax.block_until_ready(block_forward_pallas(x, params))
    ref = jax.block_until_ready(block_forward_ref(x, params))

    assert out.shape == (N, IN_C, H, W)
    assert jnp.allclose(out, ref, rtol=1e-4, atol=1e-4), \
        f"max err {jnp.max(jnp.abs(out - ref))}"

    print("KERNEL_OK")
</pallas_src>

<mosaic_0001>
module attributes {stable_mosaic.version = 11 : i64} {
  func.func @_kernel(%arg0: i32, %arg1: memref<2x4x256xf32, #tpu.memory_space<vmem>>, %arg2: memref<88x512xf32, #tpu.memory_space<vmem>>, %arg3: memref<2x4x256xf32, #tpu.memory_space<vmem>>) attributes {dimension_semantics = [#tpu.dimension_semantics<arbitrary>], iteration_bounds = array<i64: 1>, scalar_prefetch = 0 : i64, scratch_operands = 0 : i64, tpu.core_type = #tpu.core_type<tc>, window_params = [{pipeline_mode = #tpu.pipeline_mode<synchronous>, transform_indices = @transform_0, window_bounds = array<i64: 2, 4, 256>}, {pipeline_mode = #tpu.pipeline_mode<synchronous>, transform_indices = @transform_1, window_bounds = array<i64: 88, 512>}, {pipeline_mode = #tpu.pipeline_mode<synchronous>, transform_indices = @transform_2, window_bounds = array<i64: 2, 4, 256>}]} {
    %c0 = arith.constant 0 : index
    %c0_0 = arith.constant 0 : index
    %0 = vector.load %arg2[%c0, %c0_0] : memref<88x512xf32, #tpu.memory_space<vmem>>, vector<8x4xf32>
    %c8 = arith.constant 8 : index
    %c0_1 = arith.constant 0 : index
    %1 = vector.load %arg2[%c8, %c0_1] : memref<88x512xf32, #tpu.memory_space<vmem>>, vector<8x512xf32>
    %c16 = arith.constant 16 : index
    %c0_2 = arith.constant 0 : index
    %2 = vector.load %arg2[%c16, %c0_2] : memref<88x512xf32, #tpu.memory_space<vmem>>, vector<4x72xf32>
    %c20 = arith.constant 20 : index
    %c0_3 = arith.constant 0 : index
    %3 = vector.load %arg2[%c20, %c0_3] : memref<88x512xf32, #tpu.memory_space<vmem>>, vector<4x512xf32>
    %c0_4 = arith.constant 0 : index
    %c0_5 = arith.constant 0 : index
    %c0_6 = arith.constant 0 : index
    %4 = vector.load %arg1[%c0_4, %c0_5, %c0_6] : memref<2x4x256xf32, #tpu.memory_space<vmem>>, vector<1x4x256xf32>
    %5 = vector.shape_cast %4 : vector<1x4x256xf32> to vector<4x256xf32>
    %c1 = arith.constant 1 : index
    %c0_7 = arith.constant 0 : index
    %c0_8 = arith.constant 0 : index
    %6 = vector.load %arg1[%c1, %c0_7, %c0_8] : memref<2x4x256xf32, #tpu.memory_space<vmem>>, vector<1x4x256xf32>
    %7 = vector.shape_cast %6 : vector<1x4x256xf32> to vector<4x256xf32>
    %8 = tpu.concatenate %5, %7 in 1 : vector<4x256xf32>, vector<4x256xf32> -> vector<4x512xf32>
    %cst = arith.constant dense<0.000000e+00> : vector<8x512xf32>
    %9 = tpu.matmul %0, %8, %cst {dimension_numbers = #tpu.dot_dimension_numbers<[1], [0], [0], [1], [0, 0, 1, 1], [], []>} : vector<8x4xf32>, vector<4x512xf32>, vector<8x512xf32> -> vector<8x512xf32>
    %10 = arith.addf %9, %1 : vector<8x512xf32>
    %cst_9 = arith.constant 0.000000e+00 : f32
    %11 = vector.broadcast %cst_9 : f32 to vector<8x512xf32>
    %12 = arith.maximumf %10, %11 : vector<8x512xf32>
    %c17_i32 = arith.constant 17 : i32
    %13 = tpu.dynamic_rotate %12 by %c17_i32 dim 1 : vector<8x512xf32>, i32 -> vector<8x512xf32>
    %c24 = arith.constant 24 : index
    %c0_10 = arith.constant 0 : index
    %14 = vector.load %arg2[%c24, %c0_10] : memref<88x512xf32, #tpu.memory_space<vmem>>, vector<8x512xf32>
    %15 = arith.mulf %13, %14 : vector<8x512xf32>
    %c16_i32 = arith.constant 16 : i32
    %16 = tpu.dynamic_rotate %12 by %c16_i32 dim 1 : vector<8x512xf32>, i32 -> vector<8x512xf32>
    %c32 = arith.constant 32 : index
    %c0_11 = arith.constant 0 : index
    %17 = vector.load %arg2[%c32, %c0_11] : memref<88x512xf32, #tpu.memory_space<vmem>>, vector<8x512xf32>
    %18 = arith.mulf %16, %17 : vector<8x512xf32>
    %c15_i32 = arith.constant 15 : i32
    %19 = tpu.dynamic_rotate %12 by %c15_i32 dim 1 : vector<8x512xf32>, i32 -> vector<8x512xf32>
    %c40 = arith.constant 40 : index
    %c0_12 = arith.constant 0 : index
    %20 = vector.load %arg2[%c40, %c0_12] : memref<88x512xf32, #tpu.memory_space<vmem>>, vector<8x512xf32>
    %21 = arith.mulf %19, %20 : vector<8x512xf32>
    %c1_i32 = arith.constant 1 : i32
    %22 = tpu.dynamic_rotate %12 by %c1_i32 dim 1 : vector<8x512xf32>, i32 -> vector<8x512xf32>
    %c48 = arith.constant 48 : index
    %c0_13 = arith.constant 0 : index
    %23 = vector.load %arg2[%c48, %c0_13] : memref<88x512xf32, #tpu.memory_space<vmem>>, vector<8x512xf32>
    %24 = arith.mulf %22, %23 : vector<8x512xf32>
    %c511_i32 = arith.constant 511 : i32
    %25 = tpu.dynamic_rotate %12 by %c511_i32 dim 1 : vector<8x512xf32>, i32 -> vector<8x512xf32>
    %c56 = arith.constant 56 : index
    %c0_14 = arith.constant 0 : index
    %26 = vector.load %arg2[%c56, %c0_14] : memref<88x512xf32, #tpu.memory_space<vmem>>, vector<8x512xf32>
    %27 = arith.mulf %25, %26 : vector<8x512xf32>
    %c497_i32 = arith.constant 497 : i32
    %28 = tpu.dynamic_rotate %12 by %c497_i32 dim 1 : vector<8x512xf32>, i32 -> vector<8x512xf32>
    %c64 = arith.constant 64 : index
    %c0_15 = arith.constant 0 : index
    %29 = vector.load %arg2[%c64, %c0_15] : memref<88x512xf32, #tpu.memory_space<vmem>>, vector<8x512xf32>
    %30 = arith.mulf %28, %29 : vector<8x512xf32>
    %c496_i32 = arith.constant 496 : i32
    %31 = tpu.dynamic_rotate %12 by %c496_i32 dim 1 : vector<8x512xf32>, i32 -> vector<8x512xf32>
    %c72 = arith.constant 72 : index
    %c0_16 = arith.constant 0 : index
    %32 = vector.load %arg2[%c72, %c0_16] : memref<88x512xf32, #tpu.memory_space<vmem>>, vector<8x512xf32>
    %33 = arith.mulf %31, %32 : vector<8x512xf32>
    %c495_i32 = arith.constant 495 : i32
    %34 = tpu.dynamic_rotate %12 by %c495_i32 dim 1 : vector<8x512xf32>, i32 -> vector<8x512xf32>
    %c80 = arith.constant 80 : index
    %c0_17 = arith.constant 0 : index
    %35 = vector.load %arg2[%c80, %c0_17] : memref<88x512xf32, #tpu.memory_space<vmem>>, vector<8x512xf32>
    %36 = arith.mulf %34, %35 : vector<8x512xf32>
    %37 = tpu.concatenate %15, %18, %21, %24, %12, %27, %30, %33, %36 in 0 : vector<8x512xf32>, vector<8x512xf32>, vector<8x512xf32>, vector<8x512xf32>, vector<8x512xf32>, vector<8x512xf32>, vector<8x512xf32>, vector<8x512xf32>, vector<8x512xf32> -> vector<72x512xf32>
    %cst_18 = arith.constant dense<0.000000e+00> : vector<4x512xf32>
    %38 = tpu.matmul %2, %37, %cst_18 {dimension_numbers = #tpu.dot_dimension_numbers<[1], [0], [0], [1], [0, 0, 1, 1], [], []>} : vector<4x72xf32>, vector<72x512xf32>, vector<4x512xf32> -> vector<4x512xf32>
    %39 = arith.addf %38, %3 : vector<4x512xf32>
    %40 = arith.addf %39, %8 : vector<4x512xf32>
    %41 = vector.extract_strided_slice %40 {offsets = [0, 0], sizes = [4, 256], strides = [1, 1]} : vector<4x512xf32> to vector<4x256xf32>
    %c0_19 = arith.constant 0 : index
    %c0_20 = arith.constant 0 : index
    %c0_21 = arith.constant 0 : index
    %42 = vector.load %arg3[%c0_19, %c0_20, %c0_21] : memref<2x4x256xf32, #tpu.memory_space<vmem>>, vector<1x4x256xf32>
    %43 = vector.shape_cast %42 : vector<1x4x256xf32> to vector<4x256xf32>
    %44 = vector.shape_cast %41 : vector<4x256xf32> to vector<1x4x256xf32>
    tpu.vector_store %arg3[%c0_19, %c0_20, %c0_21], %44 {strides = array<i32>} : memref<2x4x256xf32, #tpu.memory_space<vmem>>, vector<1x4x256xf32>,
    %45 = vector.extract_strided_slice %40 {offsets = [0, 256], sizes = [4, 256], strides = [1, 1]} : vector<4x512xf32> to vector<4x256xf32>
    %c1_22 = arith.constant 1 : index
    %c0_23 = arith.constant 0 : index
    %c0_24 = arith.constant 0 : index
    %46 = vector.load %arg3[%c1_22, %c0_23, %c0_24] : memref<2x4x256xf32, #tpu.memory_space<vmem>>, vector<1x4x256xf32>
    %47 = vector.shape_cast %46 : vector<1x4x256xf32> to vector<4x256xf32>
    %48 = vector.shape_cast %45 : vector<4x256xf32> to vector<1x4x256xf32>
    tpu.vector_store %arg3[%c1_22, %c0_23, %c0_24], %48 {strides = array<i32>} : memref<2x4x256xf32, #tpu.memory_space<vmem>>, vector<1x4x256xf32>,
    return
  }
  func.func @transform_0(%arg0: i32) -> (i32, i32, i32) {
    %c0_i32 = arith.constant 0 : i32
    %c0_i32_0 = arith.constant 0 : i32
    %c0_i32_1 = arith.constant 0 : i32
    %c0_i32_2 = arith.constant 0 : i32
    return %c0_i32, %c0_i32_0, %c0_i32_1 : i32, i32, i32
  }
  func.func @transform_1(%arg0: i32) -> (i32, i32) {
    %c0_i32 = arith.constant 0 : i32
    %c0_i32_0 = arith.constant 0 : i32
    %c0_i32_1 = arith.constant 0 : i32
    return %c0_i32, %c0_i32_0 : i32, i32
  }
  func.func @transform_2(%arg0: i32) -> (i32, i32, i32) {
    %c0_i32 = arith.constant 0 : i32
    %c0_i32_0 = arith.constant 0 : i32
    %c0_i32_1 = arith.constant 0 : i32
    %c0_i32_2 = arith.constant 0 : i32
    return %c0_i32, %c0_i32_0, %c0_i32_1 : i32, i32, i32
  }
}

</mosaic_0001>

<llo_original>
// kernel: block_forward_pallas.1
$region0: #{block_forward_pallas.1}
  #allocation0 [shape = 'u32[]', space=smem, size = 0x4, offset = 0x4, fixed_abs, tag = 'smem constant byte address 0x4 - core index']
  #allocation1 [shape = 'u32[72,128]{1,0:T(1,128)}', space=vmem, size = 0x9000, scoped, tag = 'internal scratch']
  %s0 = inlined_call_operand.vmem [shape: f32[2,4,256], index: 0, kind: input, shape index: {}]
  %s1 = inlined_call_operand.vmem [shape: f32[88,512], index: 1, kind: input, shape index: {}]
  %s2 = inlined_call_operand.vmem [shape: f32[2,4,256], index: 2, kind: output, shape index: {}]
  %s3 = sld [smem:[#allocation0]]
  $region18: #{block_forward_pallas.1} parent=0
    _
  %s5 = ssub.s32 1, %s3
  %s6 = scalar_select 0, %s5, %s3
  // Predicated region
  $region2: #{block_forward_pallas.1} parent=0 // pred_check
    _
  $region3: #{block_forward_pallas.1} parent=0 // pred_check_branch
    %8 = sbr.rel (0) target = $region5
  $region4: #{block_forward_pallas.1} parent=0 // pred_region
    _
  $region5: #{block_forward_pallas.1} parent=0 // pred_fallthru
    _
  // Predicated region
  $region6: #{block_forward_pallas.1} parent=0 // pred_check
    _
  $region7: #{block_forward_pallas.1} parent=0 // pred_check_branch
    %10 = sbr.rel (0) target = $region9
  $region8: #{block_forward_pallas.1} parent=0 // pred_region
    _
  $region9: #{block_forward_pallas.1} parent=0 // pred_fallthru
    _
  %v11 = vld [vmem:[%s1] sm:$0xff]
  %v12 = vld [vmem:[%s1 + $0x20] sm:$0xff]
  %v13 = vld [vmem:[%s1 + $0x28] sm:$0xff]
  %v14 = vld [vmem:[%s1 + $0x30] sm:$0xff]
  %v15 = vld [vmem:[%s1 + $0x38] sm:$0xff]
  %v16 = vld [vmem:[%s1 + $0x40] sm:$0xf]
  %v17 = vld [vmem:[%s1 + $0x40] sm:$0xf0]
  %v18 = vld [vmem:[%s1 + $0x48] sm:$0xf0]
  %v19 = vld [vmem:[%s1 + $0x50] sm:$0xf0]
  %v20 = vld [vmem:[%s1 + $0x58] sm:$0xf0]
  %v21 = vld [vmem:[%s0] sm:$0xff]
  %s22 = scalar_lea.vmem %s0, 8
  %v23 = vld [vmem:[%s22] sm:$0xff]
  %25 = vst [vmem:[#allocation1] ss:$2 sm:$0xff] %v21
  %v26 = vld.sshfl [vmem:[#allocation1] sm:$0xff pattern:$0x75316420]
  %v27 = vld.sshfl [vmem:[#allocation1 + $0x8] sm:$0xff pattern:$0x75316420]
  %31 = vst [vmem:[#allocation1] ss:$2 sm:$0xff] %v23
  %v32 = vld.sshfl [vmem:[#allocation1] sm:$0xff pattern:$0x75316420]
  %v33 = vld.sshfl [vmem:[#allocation1 + $0x8] sm:$0xff pattern:$0x75316420]
  %vm36 = vcmask 31744
  %v38 = vsel %vm36, %v11, 0
  %vm40 = vcmask 1043456
  %v41 = vsel %vm40, %v26, 0
  %v43 = vsel %vm40, %v27, 0
  %v45 = vsel %vm40, %v32, 0
  %v47 = vsel %vm40, %v33, 0
  %49 = vmatpush.msra.mxu0 0.0
  %50 = vmatpush.msra.mxu0 0.0
  %51 = vmatpush.msra.mxu0 0.0
  %52 = vmatpush.msra.mxu0 0.0
  %53 = vmatpush.msra.mxu0 0.0
  %54 = vmatpush.msra.mxu0 0.0
  %55 = vmatpush.msra.mxu0 0.0
  %56 = vmatpush.msra.mxu0 0.0
  %57 = vmatpush.msra.mxu0 0.0
  %58 = vmatpush.msra.mxu0 0.0
  %59 = vmatpush.msra.mxu0 0.0
  %60 = vmatpush.msra.mxu0 0.0
  %61 = vmatpush.msra.mxu0 0.0
  %62 = vmatpush.msra.mxu0 0.0
  %63 = vmatpush.msra.mxu0 0.0
  %64 = vmatpush.msra.mxu0 %v41
  %65 = vmatmul.f32.gmra.mxu0 %v38
  %v66 = vpop.f32.mrf.mxu0
  %v67 = vadd.f32 %v12, %v66
  %68 = vdwg.mxu0
  %69 = vmatpush.msra.mxu0 0.0
  %70 = vmatpush.msra.mxu0 0.0
  %71 = vmatpush.msra.mxu0 0.0
  %72 = vmatpush.msra.mxu0 0.0
  %73 = vmatpush.msra.mxu0 0.0
  %74 = vmatpush.msra.mxu0 0.0
  %75 = vmatpush.msra.mxu0 0.0
  %76 = vmatpush.msra.mxu0 0.0
  %77 = vmatpush.msra.mxu0 0.0
  %78 = vmatpush.msra.mxu0 0.0
  %79 = vmatpush.msra.mxu0 0.0
  %80 = vmatpush.msra.mxu0 0.0
  %81 = vmatpush.msra.mxu0 0.0
  %82 = vmatpush.msra.mxu0 0.0
  %83 = vmatpush.msra.mxu0 0.0
  %84 = vmatpush.msra.mxu0 %v43
  %85 = vmatmul.f32.gmra.mxu0 %v38
  %v86 = vpop.f32.mrf.mxu0
  %v87 = vadd.f32 %v13, %v86
  %88 = vdwg.mxu0
  %89 = vmatpush.msra.mxu0 0.0
  %90 = vmatpush.msra.mxu0 0.0
  %91 = vmatpush.msra.mxu0 0.0
  %92 = vmatpush.msra.mxu0 0.0
  %93 = vmatpush.msra.mxu0 0.0
  %94 = vmatpush.msra.mxu0 0.0
  %95 = vmatpush.msra.mxu0 0.0
  %96 = vmatpush.msra.mxu0 0.0
  %97 = vmatpush.msra.mxu0 0.0
  %98 = vmatpush.msra.mxu0 0.0
  %99 = vmatpush.msra.mxu0 0.0
  %100 = vmatpush.msra.mxu0 0.0
  %101 = vmatpush.msra.mxu0 0.0
  %102 = vmatpush.msra.mxu0 0.0
  %103 = vmatpush.msra.mxu0 0.0
  %104 = vmatpush.msra.mxu0 %v45
  %105 = vmatmul.f32.gmra.mxu0 %v38
  %v106 = vpop.f32.mrf.mxu0
  %v107 = vadd.f32 %v14, %v106
  %108 = vdwg.mxu0
  %109 = vmatpush.msra.mxu0 0.0
  %110 = vmatpush.msra.mxu0 0.0
  %111 = vmatpush.msra.mxu0 0.0
  %112 = vmatpush.msra.mxu0 0.0
  %113 = vmatpush.msra.mxu0 0.0
  %114 = vmatpush.msra.mxu0 0.0
  %115 = vmatpush.msra.mxu0 0.0
  %116 = vmatpush.msra.mxu0 0.0
  %117 = vmatpush.msra.mxu0 0.0
  %118 = vmatpush.msra.mxu0 0.0
  %119 = vmatpush.msra.mxu0 0.0
  %120 = vmatpush.msra.mxu0 0.0
  %121 = vmatpush.msra.mxu0 0.0
  %122 = vmatpush.msra.mxu0 0.0
  %123 = vmatpush.msra.mxu0 0.0
  %124 = vmatpush.msra.mxu0 %v47
  %125 = vmatmul.f32.gmra.mxu0 %v38
  %v126 = vpop.f32.mrf.mxu0
  %v127 = vadd.f32 %v15, %v126
  %128 = vdwg.mxu0
  %v129 = vmax.f32 %v67, 0.0
  %v130 = vmax.f32 %v87, 0.0
  %v131 = vmax.f32 %v107, 0.0
  %v132 = vmax.f32 %v127, 0.0
  %133 = vrot.lane.b32.xlu0 %v129, 17
  %v134 = vpop.permute.xlu0 %133
  %135 = vrot.lane.b32.xlu0 %v130, 17
  %v136 = vpop.permute.xlu0 %135
  %137 = vrot.lane.b32.xlu0 %v131, 17
  %v138 = vpop.permute.xlu0 %137
  %139 = vrot.lane.b32.xlu0 %v132, 17
  %v140 = vpop.permute.xlu0 %139
  %v141 = vlaneseq
  %v142 = vand.u32 %v141, 127
  %vm143 = vcmp.lt.s32.totalorder %v142, 17
  %v144 = vsel %vm143, %v138, %v140
  %v145 = vsel %vm143, %v136, %v138
  %v146 = vsel %vm143, %v134, %v136
  %v147 = vsel %vm143, %v140, %v134
  %v148 = vld [vmem:[%s1 + $0x60] sm:$0xff]
  %v149 = vld [vmem:[%s1 + $0x68] sm:$0xff]
  %v150 = vld [vmem:[%s1 + $0x70] sm:$0xff]
  %v151 = vld [vmem:[%s1 + $0x78] sm:$0xff]
  %v152 = vmul.f32 %v147, %v148
  %v153 = vmul.f32 %v146, %v149
  %v154 = vmul.f32 %v145, %v150
  %v155 = vmul.f32 %v144, %v151
  %156 = vrot.lane.b32.xlu0 %v129, 16
  %v157 = vpop.permute.xlu0 %156
  %158 = vrot.lane.b32.xlu0 %v130, 16
  %v159 = vpop.permute.xlu0 %158
  %160 = vrot.lane.b32.xlu0 %v131, 16
  %v161 = vpop.permute.xlu0 %160
  %162 = vrot.lane.b32.xlu0 %v132, 16
  %v163 = vpop.permute.xlu0 %162
  %vm164 = vcmp.lt.s32.totalorder %v142, 16
  %v165 = vsel %vm164, %v161, %v163
  %v166 = vsel %vm164, %v159, %v161
  %v167 = vsel %vm164, %v157, %v159
  %v168 = vsel %vm164, %v163, %v157
  %v169 = vld [vmem:[%s1 + $0x80] sm:$0xff]
  %v170 = vld [vmem:[%s1 + $0x88] sm:$0xff]
  %v171 = vld [vmem:[%s1 + $0x90] sm:$0xff]
  %v172 = vld [vmem:[%s1 + $0x98] sm:$0xff]
  %v173 = vmul.f32 %v168, %v169
  %v174 = vmul.f32 %v167, %v170
  %v175 = vmul.f32 %v166, %v171
  %v176 = vmul.f32 %v165, %v172
  %177 = vrot.lane.b32.xlu0 %v129, 15
  %v178 = vpop.permute.xlu0 %177
  %179 = vrot.lane.b32.xlu0 %v130, 15
  %v180 = vpop.permute.xlu0 %179
  %181 = vrot.lane.b32.xlu0 %v131, 15
  %v182 = vpop.permute.xlu0 %181
  %183 = vrot.lane.b32.xlu0 %v132, 15
  %v184 = vpop.permute.xlu0 %183
  %vm185 = vcmp.lt.s32.totalorder %v142, 15
  %v186 = vsel %vm185, %v182, %v184
  %v187 = vsel %vm185, %v180, %v182
  %v188 = vsel %vm185, %v178, %v180
  %v189 = vsel %vm185, %v184, %v178
  %v190 = vld [vmem:[%s1 + $0xa0] sm:$0xff]
  %v191 = vld [vmem:[%s1 + $0xa8] sm:$0xff]
  %v192 = vld [vmem:[%s1 + $0xb0] sm:$0xff]
  %v193 = vld [vmem:[%s1 + $0xb8] sm:$0xff]
  %v194 = vmul.f32 %v189, %v190
  %v195 = vmul.f32 %v188, %v191
  %v196 = vmul.f32 %v187, %v192
  %v197 = vmul.f32 %v186, %v193
  %198 = vrot.lane.b32.xlu0 %v129, 1
  %v199 = vpop.permute.xlu0 %198
  %200 = vrot.lane.b32.xlu0 %v130, 1
  %v201 = vpop.permute.xlu0 %200
  %202 = vrot.lane.b32.xlu0 %v131, 1
  %v203 = vpop.permute.xlu0 %202
  %204 = vrot.lane.b32.xlu0 %v132, 1
  %v205 = vpop.permute.xlu0 %204
  %vm206 = vcmp.lt.s32.totalorder %v142, 1
  %v207 = vsel %vm206, %v203, %v205
  %v208 = vsel %vm206, %v201, %v203
  %v209 = vsel %vm206, %v199, %v201
  %v210 = vsel %vm206, %v205, %v199
  %v211 = vld [vmem:[%s1 + $0xc0] sm:$0xff]
  %v212 = vld [vmem:[%s1 + $0xc8] sm:$0xff]
  %v213 = vld [vmem:[%s1 + $0xd0] sm:$0xff]
  %v214 = vld [vmem:[%s1 + $0xd8] sm:$0xff]
  %v215 = vmul.f32 %v210, %v211
  %v216 = vmul.f32 %v209, %v212
  %v217 = vmul.f32 %v208, %v213
  %v218 = vmul.f32 %v207, %v214
  %219 = vrot.lane.b32.xlu0 %v129, 127
  %v220 = vpop.permute.xlu0 %219
  %221 = vrot.lane.b32.xlu0 %v130, 127
  %v222 = vpop.permute.xlu0 %221
  %223 = vrot.lane.b32.xlu0 %v131, 127
  %v224 = vpop.permute.xlu0 %223
  %225 = vrot.lane.b32.xlu0 %v132, 127
  %v226 = vpop.permute.xlu0 %225
  %vm227 = vcmp.lt.s32.totalorder %v142, 127
  %v228 = vsel %vm227, %v224, %v226
  %v229 = vsel %vm227, %v222, %v224
  %v230 = vsel %vm227, %v220, %v222
  %v231 = vsel %vm227, %v226, %v220
  %v232 = vld [vmem:[%s1 + $0xe0] sm:$0xff]
  %v233 = vld [vmem:[%s1 + $0xe8] sm:$0xff]
  %v234 = vld [vmem:[%s1 + $0xf0] sm:$0xff]
  %v235 = vld [vmem:[%s1 + $0xf8] sm:$0xff]
  %v236 = vmul.f32 %v230, %v232
  %v237 = vmul.f32 %v229, %v233
  %v238 = vmul.f32 %v228, %v234
  %v239 = vmul.f32 %v231, %v235
  %240 = vrot.lane.b32.xlu0 %v129, 113
  %v241 = vpop.permute.xlu0 %240
  %242 = vrot.lane.b32.xlu0 %v130, 113
  %v243 = vpop.permute.xlu0 %242
  %244 = vrot.lane.b32.xlu0 %v131, 113
  %v245 = vpop.permute.xlu0 %244
  %246 = vrot.lane.b32.xlu0 %v132, 113
  %v247 = vpop.permute.xlu0 %246
  %vm248 = vcmp.lt.s32.totalorder %v142, 113
  %v249 = vsel %vm248, %v245, %v247
  %v250 = vsel %vm248, %v243, %v245
  %v251 = vsel %vm248, %v241, %v243
  %v252 = vsel %vm248, %v247, %v241
  %v253 = vld [vmem:[%s1 + $0x100] sm:$0xff]
  %v254 = vld [vmem:[%s1 + $0x108] sm:$0xff]
  %v255 = vld [vmem:[%s1 + $0x110] sm:$0xff]
  %v256 = vld [vmem:[%s1 + $0x118] sm:$0xff]
  %v257 = vmul.f32 %v251, %v253
  %v258 = vmul.f32 %v250, %v254
  %v259 = vmul.f32 %v249, %v255
  %v260 = vmul.f32 %v252, %v256
  %261 = vrot.lane.b32.xlu0 %v129, 112
  %v262 = vpop.permute.xlu0 %261
  %263 = vrot.lane.b32.xlu0 %v130, 112
  %v264 = vpop.permute.xlu0 %263
  %265 = vrot.lane.b32.xlu0 %v131, 112
  %v266 = vpop.permute.xlu0 %265
  %267 = vrot.lane.b32.xlu0 %v132, 112
  %v268 = vpop.permute.xlu0 %267
  %vm269 = vcmp.lt.s32.totalorder %v142, 112
  %v270 = vsel %vm269, %v266, %v268
  %v271 = vsel %vm269, %v264, %v266
  %v272 = vsel %vm269, %v262, %v264
  %v273 = vsel %vm269, %v268, %v262
  %v274 = vld [vmem:[%s1 + $0x120] sm:$0xff]
  %v275 = vld [vmem:[%s1 + $0x128] sm:$0xff]
  %v276 = vld [vmem:[%s1 + $0x130] sm:$0xff]
  %v277 = vld [vmem:[%s1 + $0x138] sm:$0xff]
  %v278 = vmul.f32 %v272, %v274
  %v279 = vmul.f32 %v271, %v275
  %v280 = vmul.f32 %v270, %v276
  %v281 = vmul.f32 %v273, %v277
  %282 = vrot.lane.b32.xlu0 %v129, 111
  %v283 = vpop.permute.xlu0 %282
  %284 = vrot.lane.b32.xlu0 %v130, 111
  %v285 = vpop.permute.xlu0 %284
  %286 = vrot.lane.b32.xlu0 %v131, 111
  %v287 = vpop.permute.xlu0 %286
  %288 = vrot.lane.b32.xlu0 %v132, 111
  %v289 = vpop.permute.xlu0 %288
  %vm290 = vcmp.lt.s32.totalorder %v142, 111
  %v291 = vsel %vm290, %v287, %v289
  %v292 = vsel %vm290, %v285, %v287
  %v293 = vsel %vm290, %v283, %v285
  %v294 = vsel %vm290, %v289, %v283
  %v295 = vld [vmem:[%s1 + $0x140] sm:$0xff]
  %v296 = vld [vmem:[%s1 + $0x148] sm:$0xff]
  %v297 = vld [vmem:[%s1 + $0x150] sm:$0xff]
  %v298 = vld [vmem:[%s1 + $0x158] sm:$0xff]
  %v299 = vmul.f32 %v293, %v295
  %v300 = vmul.f32 %v292, %v296
  %v301 = vmul.f32 %v291, %v297
  %v302 = vmul.f32 %v294, %v298
  %v307 = vrot.slane %v17, 4
  %v308 = vrot.slane %v18, 4
  %v309 = vrot.slane %v19, 4
  %v310 = vrot.slane %v20, 4
  %vm315 = vcmask 588800
  %v317 = vsel %vm315, %v16, 0
  %319 = vmatpush.msra.mxu0 0.0
  %320 = vmatpush.msra.mxu0 0.0
  %321 = vmatpush.msra.mxu0 0.0
  %322 = vmatpush.msra.mxu0 0.0
  %323 = vmatpush.msra.mxu0 0.0
  %324 = vmatpush.msra.mxu0 0.0
  %325 = vmatpush.msra.mxu0 0.0
  %326 = vmatpush.msra.mxu0 %v299
  %327 = vmatpush.msra.mxu0 %v278
  %328 = vmatpush.msra.mxu0 %v257
  %329 = vmatpush.msra.mxu0 %v236
  %330 = vmatpush.msra.mxu0 %v129
  %331 = vmatpush.msra.mxu0 %v215
  %332 = vmatpush.msra.mxu0 %v194
  %333 = vmatpush.msra.mxu0 %v173
  %334 = vmatpush.msra.mxu0 %v152
  %335 = vmatmul.f32.gmra.mxu0 %v317
  %v336 = vpop.f32.mrf.mxu0
  %v337 = vadd.f32 %v307, %v336
  %338 = vdwg.mxu0
  %339 = vmatpush.msra.mxu0 0.0
  %340 = vmatpush.msra.mxu0 0.0
  %341 = vmatpush.msra.mxu0 0.0
  %342 = vmatpush.msra.mxu0 0.0
  %343 = vmatpush.msra.mxu0 0.0
  %344 = vmatpush.msra.mxu0 0.0
  %345 = vmatpush.msra.mxu0 0.0
  %346 = vmatpush.msra.mxu0 %v300
  %347 = vmatpush.msra.mxu0 %v279
  %348 = vmatpush.msra.mxu0 %v258
  %349 = vmatpush.msra.mxu0 %v237
  %350 = vmatpush.msra.mxu0 %v130
  %351 = vmatpush.msra.mxu0 %v216
  %352 = vmatpush.msra.mxu0 %v195
  %353 = vmatpush.msra.mxu0 %v174
  %354 = vmatpush.msra.mxu0 %v153
  %355 = vmatmul.f32.gmra.mxu0 %v317
  %v356 = vpop.f32.mrf.mxu0
  %v357 = vadd.f32 %v308, %v356
  %358 = vdwg.mxu0
  %359 = vmatpush.msra.mxu0 0.0
  %360 = vmatpush.msra.mxu0 0.0
  %361 = vmatpush.msra.mxu0 0.0
  %362 = vmatpush.msra.mxu0 0.0
  %363 = vmatpush.msra.mxu0 0.0
  %364 = vmatpush.msra.mxu0 0.0
  %365 = vmatpush.msra.mxu0 0.0
  %366 = vmatpush.msra.mxu0 %v301
  %367 = vmatpush.msra.mxu0 %v280
  %368 = vmatpush.msra.mxu0 %v259
  %369 = vmatpush.msra.mxu0 %v238
  %370 = vmatpush.msra.mxu0 %v131
  %371 = vmatpush.msra.mxu0 %v217
  %372 = vmatpush.msra.mxu0 %v196
  %373 = vmatpush.msra.mxu0 %v175
  %374 = vmatpush.msra.mxu0 %v154
  %375 = vmatmul.f32.gmra.mxu0 %v317
  %v376 = vpop.f32.mrf.mxu0
  %v377 = vadd.f32 %v309, %v376
  %378 = vdwg.mxu0
  %379 = vmatpush.msra.mxu0 0.0
  %380 = vmatpush.msra.mxu0 0.0
  %381 = vmatpush.msra.mxu0 0.0
  %382 = vmatpush.msra.mxu0 0.0
  %383 = vmatpush.msra.mxu0 0.0
  %384 = vmatpush.msra.mxu0 0.0
  %385 = vmatpush.msra.mxu0 0.0
  %386 = vmatpush.msra.mxu0 %v302
  %387 = vmatpush.msra.mxu0 %v281
  %388 = vmatpush.msra.mxu0 %v260
  %389 = vmatpush.msra.mxu0 %v239
  %390 = vmatpush.msra.mxu0 %v132
  %391 = vmatpush.msra.mxu0 %v218
  %392 = vmatpush.msra.mxu0 %v197
  %393 = vmatpush.msra.mxu0 %v176
  %394 = vmatpush.msra.mxu0 %v155
  %395 = vmatmul.f32.gmra.mxu0 %v317
  %v396 = vpop.f32.mrf.mxu0
  %v397 = vadd.f32 %v310, %v396
  %398 = vdwg.mxu0
  %v399 = vadd.f32 %v337, %v26
  %v400 = vadd.f32 %v357, %v27
  %v401 = vadd.f32 %v377, %v32
  %v402 = vadd.f32 %v397, %v33
  %v405 = vrot.slane %v400, 4
  %v406 = vsel %vm40, %v399, %v405
  %408 = vst [vmem:[%s2] sm:$0xff] %v406
  %v411 = vrot.slane %v402, 4
  %v412 = vsel %vm40, %v401, %v411
  %s414 = scalar_lea.vmem %s2, 8
  %415 = vst [vmem:[%s414] sm:$0xff] %v412
  // Predicated region
  $region10: #{block_forward_pallas.1} parent=0 // pred_check
    _
  $region11: #{block_forward_pallas.1} parent=0 // pred_check_branch
    %417 = sbr.rel (0) target = $region13
  $region12: #{block_forward_pallas.1} parent=0 // pred_region
    _
  $region13: #{block_forward_pallas.1} parent=0 // pred_fallthru
    _
  // Predicated region
  $region14: #{block_forward_pallas.1} parent=0 // pred_check
    _
  $region15: #{block_forward_pallas.1} parent=0 // pred_check_branch
    %419 = sbr.rel (0) target = $region17
  $region16: #{block_forward_pallas.1} parent=0 // pred_region
    _
  $region17: #{block_forward_pallas.1} parent=0 // pred_fallthru
    _

</llo_original>
